<compile_context>
chip_gen: v7x
topology: tpu7x:2x2x1
jax: 0.10.0
libtpu: 0.0.40
codegen_flags: <defaults>
</compile_context>

<pallas_src>
import functools

import jax
import jax.numpy as jnp
from jax.experimental import pallas as pl
from jax.experimental.pallas import tpu as pltpu


def _group_norm_kernel(x_ref, gamma_ref, beta_ref, o_ref, *, eps, inv_n):
    # x_ref / o_ref: (BN, TG, L);  gamma_ref / beta_ref: (TG, L)
    # Pass 1: mean per group row (fp32).
    xf = x_ref[...].astype(jnp.float32)
    mean = jnp.sum(xf, axis=-1, keepdims=True) * inv_n            # (BN, TG, 1)

    # Pass 2: centered sum of squares (numerically robust, matches torch).
    d = x_ref[...].astype(jnp.float32) - mean
    var = jnp.sum(d * d, axis=-1, keepdims=True) * inv_n          # (BN, TG, 1)
    inv_std = jax.lax.rsqrt(var + eps)                            # (BN, TG, 1)

    # Fused normalize + affine: y = x * scale + shift.
    # gamma/beta are (TG, L) and broadcast over the BN batch-block dim.
    scale = gamma_ref[...].astype(jnp.float32) * inv_std          # (BN, TG, L)
    shift = beta_ref[...].astype(jnp.float32) - mean * scale      # (BN, TG, L)
    # Re-read x_ref here instead of reusing `xf` so no full-block fp32 temp
    # must survive across the reductions (cheap VMEM re-load, hidden by DMA).
    o_ref[...] = (x_ref[...].astype(jnp.float32) * scale + shift).astype(o_ref.dtype)


def _vmem_capacity_bytes():
    try:
        return int(pltpu.get_tpu_info().vmem_capacity_bytes)
    except Exception:
        return 64 * 1024 * 1024  # conservative (v7x per-TC)


def _pick_tiles(N, G, L, itemsize, budget_bytes):
    """Pick (BN, TG): divisors of (N, G) maximizing BN*TG*L under the budget.

    TG must be a multiple of 8 (sublane alignment) or equal to G. Prefers a
    grid with >= 2 steps so both v7x TensorCores get work.
    """
    row_bytes = L * max(int(itemsize), 4)   # fp32 temps dominate sizing
    tg_cands = sorted(d for d in range(1, G + 1)
                      if G % d == 0 and (d % 8 == 0 or d == G))
    bn_cands = sorted(d for d in range(1, N + 1) if N % d == 0)

    bn, tg = 1, tg_cands[0]                 # minimal fallback (never larger than budget pick)
    best = 0
    for t in tg_cands:
        for b in bn_cands:
            if b * t * row_bytes <= budget_bytes and b * t > best:
                best, bn, tg = b * t, b, t

    # Megacore: prefer >= 2 grid steps if there is any way to split.
    if (N // bn) * (G // tg) < 2:
        smaller_bn = [d for d in bn_cands if d < bn]
        smaller_tg = [d for d in tg_cands if d < tg]
        if smaller_bn:
            bn = max(smaller_bn)
        elif smaller_tg:
            tg = max(smaller_tg)
    return bn, tg


def prepare_affine(gamma, beta, num_groups, spatial_size):
    """Expand per-channel affine params to per-element (G, L) rows.

    Do this ONCE (outside the hot path) — it is a pure function of the model
    parameters, so repeated forward calls pay no extra HBM traffic for it.
    """
    C = gamma.shape[0]
    G = num_groups
    assert C % G == 0, "channels must be divisible by num_groups"
    Cg = C // G
    L = Cg * spatial_size
    gamma_r = jnp.broadcast_to(gamma.reshape(G, Cg, 1), (G, Cg, spatial_size)).reshape(G, L)
    beta_r = jnp.broadcast_to(beta.reshape(G, Cg, 1), (G, Cg, spatial_size)).reshape(G, L)
    return gamma_r, beta_r


def group_norm(x, gamma_expanded, beta_expanded, num_groups, eps=1e-6):
    """GroupNorm forward. x: (N, C, H, W); gamma/beta pre-expanded to (G, L)."""
    N, C, H, W = x.shape
    G = num_groups
    assert C % G == 0, "channels must be divisible by num_groups"
    Cg = C // G
    HW = H * W
    L = Cg * HW  # flattened per-group length -> lane axis
    assert gamma_expanded.shape == (G, L) and beta_expanded.shape == (G, L)
    # TODO(synk): pad L to a multiple of 128 (masked mean/var) when Cg*H*W is
    # not lane-aligned, to avoid masked partial stores in the general case.

    x_r = x.reshape(N, G, L)

    # Per-generation VMEM budgets.
    vmem_cap = _vmem_capacity_bytes()
    x_block_budget = max(512 * 1024, min(8 * 1024 * 1024, vmem_cap // 16))
    vmem_limit = int(min(vmem_cap * 3 // 4, 96 * 1024 * 1024))

    BN, TG = _pick_tiles(N, G, L, x.dtype.itemsize, x_block_budget)

    block_bytes = BN * TG * L * max(int(x.dtype.itemsize), 4)
    if 6 * block_bytes > vmem_cap:
        # TODO(synk): tile the reduction over L (extra 'arbitrary' grid axis
        # with sum/sumsq accumulators + second normalize pass) for very large
        # per-group sizes; the single-block reduction does not fit VMEM here.
        raise NotImplementedError("per-group size Cg*H*W too large for single-block reduction")

    # Grid ordered (group-tiles, batch-tiles): gamma/beta block index is
    # constant across the inner batch axis, so their DMA is reused.
    grid = (G // TG, N // BN)

    kernel = functools.partial(_group_norm_kernel, eps=float(eps), inv_n=1.0 / float(L))

    out = pl.pallas_call(
        kernel,
        out_shape=jax.ShapeDtypeStruct((N, G, L), x.dtype),
        grid_spec=pltpu.PrefetchScalarGridSpec(
            num_scalar_prefetch=0,
            grid=grid,
            in_specs=[
                pl.BlockSpec((BN, TG, L), lambda gi, nb: (nb, gi, 0)),
                pl.BlockSpec((TG, L), lambda gi, nb: (gi, 0)),
                pl.BlockSpec((TG, L), lambda gi, nb: (gi, 0)),
            ],
            out_specs=pl.BlockSpec((BN, TG, L), lambda gi, nb: (nb, gi, 0)),
        ),
        compiler_params=pltpu.CompilerParams(
            dimension_semantics=("parallel", "parallel"),
            vmem_limit_bytes=vmem_limit,
        ),
    )(x_r, gamma_expanded, beta_expanded)

    return out.reshape(N, C, H, W)


if __name__ == "__main__":
    # Module config: GroupNorm(channels=64) with default num_groups=32, eps=1e-6.
    N, C, H, W = 2, 64, 8, 8
    num_groups = 32

    key = jax.random.PRNGKey(0)
    kx, kg, kb = jax.random.split(key, 3)
    x = jax.random.normal(kx, (N, C, H, W), dtype=jnp.float32)
    # Non-trivial affine params to exercise the scale/shift path
    # (nn.GroupNorm default init is ones/zeros; any values are valid weights).
    gamma = 1.0 + 0.1 * jax.random.normal(kg, (C,), dtype=jnp.float32)
    beta = 0.1 * jax.random.normal(kb, (C,), dtype=jnp.float32)

    # Hoisted affine expansion (done once, outside the hot path).
    gamma_r, beta_r = prepare_affine(gamma, beta, num_groups, H * W)

    y = group_norm(x, gamma_r, beta_r, num_groups=num_groups, eps=1e-6)
    y = jax.block_until_ready(y)

    # Pure-JAX reference.
    xr = x.reshape(N, num_groups, -1)
    mean = xr.mean(axis=-1, keepdims=True)
    var = xr.var(axis=-1, keepdims=True)
    ref = ((xr - mean) / jnp.sqrt(var + 1e-6)).reshape(N, C, H, W)
    ref = ref * gamma[None, :, None, None] + beta[None, :, None, None]
    assert jnp.max(jnp.abs(y - ref)) < 1e-4, "mismatch vs reference"

    print("KERNEL_OK")
</pallas_src>

<mosaic_0001>
module attributes {stable_mosaic.version = 11 : i64} {
  func.func @_group_norm_kernel(%arg0: i32, %arg1: i32, %arg2: memref<1x32x128xf32, #tpu.memory_space<vmem>>, %arg3: memref<32x128xf32, #tpu.memory_space<vmem>>, %arg4: memref<32x128xf32, #tpu.memory_space<vmem>>, %arg5: memref<1x32x128xf32, #tpu.memory_space<vmem>>) attributes {dimension_semantics = [#tpu.dimension_semantics<parallel>, #tpu.dimension_semantics<parallel>], iteration_bounds = array<i64: 1, 2>, scalar_prefetch = 0 : i64, scratch_operands = 0 : i64, tpu.core_type = #tpu.core_type<tc>, window_params = [{transform_indices = @transform_0, window_bounds = array<i64: 1, 32, 128>}, {transform_indices = @transform_1, window_bounds = array<i64: 32, 128>}, {transform_indices = @transform_2, window_bounds = array<i64: 32, 128>}, {transform_indices = @transform_3, window_bounds = array<i64: 1, 32, 128>}]} {
    %c0 = arith.constant 0 : index
    %c0_0 = arith.constant 0 : index
    %c0_1 = arith.constant 0 : index
    %0 = vector.load %arg2[%c0, %c0_0, %c0_1] : memref<1x32x128xf32, #tpu.memory_space<vmem>>, vector<1x32x128xf32>
    %cst = arith.constant dense<0.000000e+00> : vector<1x32xf32>
    %1 = vector.multi_reduction <add>, %0, %cst [2] : vector<1x32x128xf32> to vector<1x32xf32>
    %2 = vector.shape_cast %1 : vector<1x32xf32> to vector<1x32x1xf32>
    %cst_2 = arith.constant 7.812500e-03 : f32
    %3 = vector.broadcast %cst_2 : f32 to vector<1x32x1xf32>
    %4 = arith.mulf %2, %3 : vector<1x32x1xf32>
    %c0_3 = arith.constant 0 : index
    %c0_4 = arith.constant 0 : index
    %c0_5 = arith.constant 0 : index
    %5 = vector.load %arg2[%c0_3, %c0_4, %c0_5] : memref<1x32x128xf32, #tpu.memory_space<vmem>>, vector<1x32x128xf32>
    %6 = vector.broadcast %4 : vector<1x32x1xf32> to vector<1x32x128xf32>
    %7 = arith.subf %5, %6 : vector<1x32x128xf32>
    %8 = arith.mulf %7, %7 : vector<1x32x128xf32>
    %cst_6 = arith.constant dense<0.000000e+00> : vector<1x32xf32>
    %9 = vector.multi_reduction <add>, %8, %cst_6 [2] : vector<1x32x128xf32> to vector<1x32xf32>
    %10 = vector.shape_cast %9 : vector<1x32xf32> to vector<1x32x1xf32>
    %cst_7 = arith.constant 7.812500e-03 : f32
    %11 = vector.broadcast %cst_7 : f32 to vector<1x32x1xf32>
    %12 = arith.mulf %10, %11 : vector<1x32x1xf32>
    %cst_8 = arith.constant 9.99999997E-7 : f32
    %13 = vector.broadcast %cst_8 : f32 to vector<1x32x1xf32>
    %14 = arith.addf %12, %13 : vector<1x32x1xf32>
    %15 = math.rsqrt %14 : vector<1x32x1xf32>
    %c0_9 = arith.constant 0 : index
    %c0_10 = arith.constant 0 : index
    %16 = vector.load %arg3[%c0_9, %c0_10] : memref<32x128xf32, #tpu.memory_space<vmem>>, vector<32x128xf32>
    %17 = vector.shape_cast %16 : vector<32x128xf32> to vector<1x32x128xf32>
    %18 = vector.broadcast %15 : vector<1x32x1xf32> to vector<1x32x128xf32>
    %19 = arith.mulf %17, %18 : vector<1x32x128xf32>
    %c0_11 = arith.constant 0 : index
    %c0_12 = arith.constant 0 : index
    %20 = vector.load %arg4[%c0_11, %c0_12] : memref<32x128xf32, #tpu.memory_space<vmem>>, vector<32x128xf32>
    %21 = vector.broadcast %4 : vector<1x32x1xf32> to vector<1x32x128xf32>
    %22 = arith.mulf %21, %19 : vector<1x32x128xf32>
    %23 = vector.shape_cast %20 : vector<32x128xf32> to vector<1x32x128xf32>
    %24 = arith.subf %23, %22 : vector<1x32x128xf32>
    %c0_13 = arith.constant 0 : index
    %c0_14 = arith.constant 0 : index
    %c0_15 = arith.constant 0 : index
    %25 = vector.load %arg2[%c0_13, %c0_14, %c0_15] : memref<1x32x128xf32, #tpu.memory_space<vmem>>, vector<1x32x128xf32>
    %26 = arith.mulf %25, %19 : vector<1x32x128xf32>
    %27 = arith.addf %26, %24 : vector<1x32x128xf32>
    %c0_16 = arith.constant 0 : index
    %c0_17 = arith.constant 0 : index
    %c0_18 = arith.constant 0 : index
    %28 = vector.load %arg5[%c0_16, %c0_17, %c0_18] : memref<1x32x128xf32, #tpu.memory_space<vmem>>, vector<1x32x128xf32>
    tpu.vector_store %arg5[%c0_16, %c0_17, %c0_18], %27 {strides = array<i32>} : memref<1x32x128xf32, #tpu.memory_space<vmem>>, vector<1x32x128xf32>,
    return
  }
  func.func @transform_0(%arg0: i32, %arg1: i32) -> (i32, i32, i32) {
    %c0_i32 = arith.constant 0 : i32
    %c0_i32_0 = arith.constant 0 : i32
    return %arg1, %arg0, %c0_i32 : i32, i32, i32
  }
  func.func @transform_1(%arg0: i32, %arg1: i32) -> (i32, i32) {
    %c0_i32 = arith.constant 0 : i32
    %c0_i32_0 = arith.constant 0 : i32
    return %arg0, %c0_i32 : i32, i32
  }
  func.func @transform_2(%arg0: i32, %arg1: i32) -> (i32, i32) {
    %c0_i32 = arith.constant 0 : i32
    %c0_i32_0 = arith.constant 0 : i32
    return %arg0, %c0_i32 : i32, i32
  }
  func.func @transform_3(%arg0: i32, %arg1: i32) -> (i32, i32, i32) {
    %c0_i32 = arith.constant 0 : i32
    %c0_i32_0 = arith.constant 0 : i32
    return %arg1, %arg0, %c0_i32 : i32, i32, i32
  }
}

</mosaic_0001>

<llo_original>
// kernel: tpu_custom_call.1
$region0: #{tpu_custom_call.1}
  #allocation0 [shape = 'u32[]', space=smem, size = 0x4, offset = 0x4, fixed_abs, tag = 'smem constant byte address 0x4 - core index']
  #allocation1 [shape = 'u32[144,128]{1,0:T(1,128)}', space=vmem, size = 0x12000, scoped, tag = 'internal scratch']
  %s0 = inlined_call_operand.hbm [shape: f32[2,32,128], index: 0, kind: input, shape index: {}]
  %s1 = inlined_call_operand.hbm [shape: f32[32,128], index: 1, kind: input, shape index: {}]
  %s2 = inlined_call_operand.hbm [shape: f32[32,128], index: 2, kind: input, shape index: {}]
  %s3 = inlined_call_operand.hbm [shape: f32[2,32,128], index: 3, kind: output, shape index: {}]
  %s4 = sld [smem:[#allocation0]]
  $region57: #{tpu_custom_call.1} parent=0
    _
  %s6 = ssub.s32 1, %s4
  %s7 = scalar_select 0, %s6, %s4
  $region1: #{tpu_custom_call.1} parent=0
    #allocation2 [shape = 'u8[32768]{0}', space=vmem, size = 0x8000, scoped, tag = 'input window, operand 0']
    #allocation3 [shape = 's32[2]{0}', space=sflag, size = 0x8, scoped, tag = 'scoped memory for tpu_custom_call.1']
    #allocation4 [shape = 's32[2]{0}', space=sflag, size = 0x8, scoped, tag = 'scoped memory for tpu_custom_call.1']
    #allocation5 [shape = 'u8[16384]{0}', space=vmem, size = 0x4000, scoped, tag = 'input window, operand 1, single buffered']
    #allocation6 [shape = 's32[1]{0}', space=sflag, size = 0x4, scoped, tag = 'scoped memory for tpu_custom_call.1']
    #allocation7 [shape = 'u8[16384]{0}', space=vmem, size = 0x4000, scoped, tag = 'input window, operand 2, single buffered']
    #allocation8 [shape = 'u8[32768]{0}', space=vmem, size = 0x8000, scoped, tag = 'output window, operand 0']
    %8 = vsyncpa [#allocation3], 0
    %s9 = scalar_lea.sflag [#allocation3], 1
    %10 = vsyncpa %s9, 0
    %11 = vsyncpa [#allocation6], 0
    %12 = vsyncpa [#allocation4], 0
    %s13 = scalar_lea.sflag [#allocation4], 1
    %14 = vsyncpa %s13, 0
    loop: start=0, step=1, limit=4
    $region2: #{tpu_custom_call.1} parent=1 // loop_pre_header
      _
    $region3: #{tpu_custom_call.1} parent=1 // loop_header
      %s16 = sphi 0, %s20
      %p17 = scmp.ge.s32.totalorder %s16, 4
      %s23 = sphi 0, %s35
      %s24 = sphi 0, %s31
      %s25 = sphi 0, %s23
      %s26 = sphi 0, %s24
      %s27 = sphi 0, %s25
      %s28 = sphi 0, %s26
      %s40 = sphi 0, %s42
      %s43 = sphi 0, %s40
      %s44 = sphi 0, %s43
      %s60 = sphi 0, %s44
      %s66 = sphi 0, %s68
      %s69 = sphi 0, %s66
      %s70 = sphi 0, %s69
      %s86 = sphi 0, %s70
      %s92 = sphi 0, %s94
      %s95 = sphi 0, %s92
      %s96 = sphi 0, %s95
      %s112 = sphi 0, %s96
      %s120 = sphi 0, %s122
      %s123 = sphi 0, %s120
      %s124 = sphi 0, %s123
      %s140 = sphi 0, %s124
    $region4: #{tpu_custom_call.1} parent=1 // loop_header_branch
      %19 = sbr.rel (%p17) target = $region8
    $region5: #{tpu_custom_call.1} parent=1 // loop_body
      %s21 = ssub.s32 %s16, 1
      %s22 = ssub.s32 %s16, 2
      %s29 = sadd.s32 1, %s24
      %p30 = scmp.ge.s32.totalorder %s29, 2
      %s31 = scalar_select %p30, 0, %s29
      %s32 = sadd.s32 1, %s23
      %s33 = scalar_select %p30, %s32, %s23
      %p34 = scmp.ge.s32.totalorder %s33, 1
      %s35 = scalar_select %p34, 0, %s33
      %s36 = ssub.s32 %s24, %s31
      %s37 = ssub.s32 %s23, %s35
      %s38 = sor.u32 %s36, %s37
      %p39 = scmp.eq.s32.totalorder %s38, 0
      %s41 = sadd.s32 %s40, 1
      %s42 = scalar_select %p39, %s40, %s41
      %p45 = pneg %p39
      %p46 = scmp.eq.s32.totalorder %s16, 1
      %p47 = por %p45, %p46
      %p48 = scmp.ne.s32.totalorder %s40, %s43
      %p49 = scmp.eq.s32.totalorder %s16, 0
      %p50 = por %p48, %p49
      %p51 = scmp.ne.s32.totalorder %s40, %s43
      %p52 = scmp.eq.s32.totalorder %s21, 1
      %p53 = por %p51, %p52
      %p54 = scmp.ne.s32.totalorder %s43, %s44
      %p55 = scmp.eq.s32.totalorder %s21, 0
      %p56 = por %p54, %p55
      %p57 = scmp.ne.s32.totalorder %s43, %s44
      %p58 = scmp.eq.s32.totalorder %s22, 1
      %p59 = por %p57, %p58
      %p61 = scmp.ne.s32.totalorder %s44, %s60
      %p62 = scmp.eq.s32.totalorder %s22, 0
      %p63 = por %p61, %p62
      %s64 = ssub.s32 %s23, %s35
      %p65 = scmp.eq.s32.totalorder %s64, 0
      %s67 = sadd.s32 %s66, 1
      %s68 = scalar_select %p65, %s66, %s67
      %p71 = pneg %p65
      %p72 = scmp.eq.s32.totalorder %s16, 1
      %p73 = por %p71, %p72
      %p74 = scmp.ne.s32.totalorder %s66, %s69
      %p75 = scmp.eq.s32.totalorder %s16, 0
      %p76 = por %p74, %p75
      %p77 = scmp.ne.s32.totalorder %s66, %s69
      %p78 = scmp.eq.s32.totalorder %s21, 1
      %p79 = por %p77, %p78
      %p80 = scmp.ne.s32.totalorder %s69, %s70
      %p81 = scmp.eq.s32.totalorder %s21, 0
      %p82 = por %p80, %p81
      %p83 = scmp.ne.s32.totalorder %s69, %s70
      %p84 = scmp.eq.s32.totalorder %s22, 1
      %p85 = por %p83, %p84
      %p87 = scmp.ne.s32.totalorder %s70, %s86
      %p88 = scmp.eq.s32.totalorder %s22, 0
      %p89 = por %p87, %p88
      %s90 = ssub.s32 %s23, %s35
      %p91 = scmp.eq.s32.totalorder %s90, 0
      %s93 = sadd.s32 %s92, 1
      %s94 = scalar_select %p91, %s92, %s93
      %p97 = pneg %p91
      %p98 = scmp.eq.s32.totalorder %s16, 1
      %p99 = por %p97, %p98
      %p100 = scmp.ne.s32.totalorder %s92, %s95
      %p101 = scmp.eq.s32.totalorder %s16, 0
      %p102 = por %p100, %p101
      %p103 = scmp.ne.s32.totalorder %s92, %s95
      %p104 = scmp.eq.s32.totalorder %s21, 1
      %p105 = por %p103, %p104
      %p106 = scmp.ne.s32.totalorder %s95, %s96
      %p107 = scmp.eq.s32.totalorder %s21, 0
      %p108 = por %p106, %p107
      %p109 = scmp.ne.s32.totalorder %s95, %s96
      %p110 = scmp.eq.s32.totalorder %s22, 1
      %p111 = por %p109, %p110
      %p113 = scmp.ne.s32.totalorder %s96, %s112
      %p114 = scmp.eq.s32.totalorder %s22, 0
      %p115 = por %p113, %p114
      %s116 = ssub.s32 %s24, %s31
      %s117 = ssub.s32 %s23, %s35
      %s118 = sor.u32 %s116, %s117
      %p119 = scmp.eq.s32.totalorder %s118, 0
      %s121 = sadd.s32 %s120, 1
      %s122 = scalar_select %p119, %s120, %s121
      %p125 = pneg %p119
      %p126 = scmp.eq.s32.totalorder %s16, 1
      %p127 = por %p125, %p126
      %p128 = scmp.ne.s32.totalorder %s120, %s123
      %p129 = scmp.eq.s32.totalorder %s16, 0
      %p130 = por %p128, %p129
      %p131 = scmp.ne.s32.totalorder %s120, %s123
      %p132 = scmp.eq.s32.totalorder %s21, 1
      %p133 = por %p131, %p132
      %p134 = scmp.ne.s32.totalorder %s123, %s124
      %p135 = scmp.eq.s32.totalorder %s21, 0
      %p136 = por %p134, %p135
      %p137 = scmp.ne.s32.totalorder %s123, %s124
      %p138 = scmp.eq.s32.totalorder %s22, 1
      %p139 = por %p137, %p138
      %p141 = scmp.ne.s32.totalorder %s124, %s140
      %p142 = scmp.eq.s32.totalorder %s22, 0
      %p143 = por %p141, %p142
      %p144 = scmp.le.s32.totalorder 1, %s16
      %p145 = scmp.lt.s32.totalorder %s16, 3
      %p146 = pnand %p144, %p145
      %p147 = pneg %p146
      // Predicated region
      $region9: #{tpu_custom_call.1} parent=5 // pred_check
        _
      $region10: #{tpu_custom_call.1} parent=5 // pred_check_branch
        %149 = sbr.rel (%p146) target = $region12
      $region11: #{tpu_custom_call.1} parent=5 // pred_region
        %s150 = ssub.s32 %s16, 1
        // Predicated region
        $region13: #{tpu_custom_call.1} parent=11 // pred_check
          %p151 = pneg %p82
        $region14: #{tpu_custom_call.1} parent=11 // pred_check_branch
          %153 = sbr.rel (%p151) target = $region16
        $region15: #{tpu_custom_call.1} parent=11 // pred_region
          %s154 = smul.u32 4, %s25
          %s156 = ssub.s32 512, 512
          %157 = vsyncadd [#allocation6], %s156
          %s158 = smul.addr %s154, 128
          %s159 = scalar_lea.hbm %s1, %s158
          %s160 = sshll.u32 [#allocation5], 4
          %s161 = int_to_ptr.vmem [resolvable:$true] %s160
          %166 = dma.hbm_to_vmem [thread:$0]  %s159, 512, %s161, [#allocation6], 128, 128, 8
        $region16: #{tpu_custom_call.1} parent=11 // pred_fallthru
          _
        // Predicated region
        $region17: #{tpu_custom_call.1} parent=11 // pred_check
          %p167 = pneg %p108
        $region18: #{tpu_custom_call.1} parent=11 // pred_check_branch
          %169 = sbr.rel (%p167) target = $region20
        $region19: #{tpu_custom_call.1} parent=11 // pred_region
          %s170 = smul.u32 4, %s25
          %s172 = ssub.s32 512, 512
          %173 = vsyncadd [#allocation6], %s172
          %s174 = smul.addr %s170, 128
          %s175 = scalar_lea.hbm %s2, %s174
          %s176 = sshll.u32 [#allocation7], 4
          %s177 = int_to_ptr.vmem [resolvable:$true] %s176
          %182 = dma.hbm_to_vmem [thread:$0]  %s175, 512, %s177, [#allocation6], 128, 128, 8
        $region20: #{tpu_custom_call.1} parent=11 // pred_fallthru
          _
      $region12: #{tpu_custom_call.1} parent=5 // pred_fallthru
        _
      %p183 = scmp.lt.s32.totalorder %s16, 2
      // Predicated region
      $region21: #{tpu_custom_call.1} parent=5 // pred_check
        %p184 = pneg %p183
      $region22: #{tpu_custom_call.1} parent=5 // pred_check_branch
        %186 = sbr.rel (%p184) target = $region24
      $region23: #{tpu_custom_call.1} parent=5 // pred_region
        // Predicated region
        $region25: #{tpu_custom_call.1} parent=23 // pred_check
          %p187 = pneg %p50
        $region26: #{tpu_custom_call.1} parent=23 // pred_check_branch
          %189 = sbr.rel (%p187) target = $region28
        $region27: #{tpu_custom_call.1} parent=23 // pred_region
          %s190 = sand.u32 %s40, 1
          %s191 = scalar_lea.sflag [#allocation3], %s190
          %s192 = sand.u32 %s40, 1
          %s193 = smul.addr %s192, 32
          %s194 = scalar_lea.vmem [#allocation2], %s193
          %s195 = smul.u32 4, %s23
          %s197 = ssub.s32 512, 512
          %198 = vsyncadd %s191, %s197
          %s199 = smul.addr %s24, 4
          %s200 = sadd.s32 %s195, %s199
          %s201 = smul.addr %s200, 128
          %s202 = scalar_lea.hbm %s0, %s201
          %s203 = sshll.u32 %s194, 4
          %s204 = int_to_ptr.vmem [resolvable:$true] %s203
          %209 = dma.hbm_to_vmem [thread:$0]  %s202, 512, %s204, %s191, 128, 128, 8
        $region28: #{tpu_custom_call.1} parent=23 // pred_fallthru
          _
      $region24: #{tpu_custom_call.1} parent=5 // pred_fallthru
        _
      %p210 = scmp.le.s32.totalorder 1, %s16
      %p211 = scmp.lt.s32.totalorder %s16, 3
      %p212 = pnand %p210, %p211
      %p213 = pneg %p212
      // Predicated region
      $region29: #{tpu_custom_call.1} parent=5 // pred_check
        _
      $region30: #{tpu_custom_call.1} parent=5 // pred_check_branch
        %215 = sbr.rel (%p212) target = $region32
      $region31: #{tpu_custom_call.1} parent=5 // pred_region
        %s216 = ssub.s32 %s16, 1
        %s217 = sand.u32 %s43, 1
        %s218 = scalar_lea.sflag [#allocation3], %s217
        %s219 = sand.u32 %s43, 1
        %s220 = smul.addr %s219, 32
        %s221 = scalar_lea.vmem [#allocation2], %s220
        // Predicated region
        $region33: #{tpu_custom_call.1} parent=31 // pred_check
          %p222 = pneg %p56
        $region34: #{tpu_custom_call.1} parent=31 // pred_check_branch
          %224 = sbr.rel (%p222) target = $region36
        $region35: #{tpu_custom_call.1} parent=31 // pred_region
          %225 = dma.done %s218, 512
        $region36: #{tpu_custom_call.1} parent=31 // pred_fallthru
          _
        // Predicated region
        $region37: #{tpu_custom_call.1} parent=31 // pred_check
          %p226 = pneg %p82
        $region38: #{tpu_custom_call.1} parent=31 // pred_check_branch
          %228 = sbr.rel (%p226) target = $region40
        $region39: #{tpu_custom_call.1} parent=31 // pred_region
          %229 = dma.done [#allocation6], 512
        $region40: #{tpu_custom_call.1} parent=31 // pred_fallthru
          _
        // Predicated region
        $region41: #{tpu_custom_call.1} parent=31 // pred_check
          %p230 = pneg %p108
        $region42: #{tpu_custom_call.1} parent=31 // pred_check_branch
          %232 = sbr.rel (%p230) target = $region44
        $region43: #{tpu_custom_call.1} parent=31 // pred_region
          %233 = dma.done [#allocation6], 512
        $region44: #{tpu_custom_call.1} parent=31 // pred_fallthru
          _
        %s234 = sand.u32 %s43, 1
        %s235 = scalar_lea.sflag [#allocation3], %s234
        %s236 = sand.u32 %s43, 1
        %s237 = smul.addr %s236, 32
        %s238 = scalar_lea.vmem [#allocation2], %s237
        %p239 = pneg %p56
        %p240 = pneg %p53
        %p241 = pneg %p82
        %p242 = pneg %p79
        %p243 = pneg %p108
        %p244 = pneg %p105
        %p245 = pneg %p136
        %p246 = pneg %p133
        %s247 = sand.u32 %s123, 1
        %s248 = scalar_lea.sflag [#allocation4], %s247
        %s249 = sand.u32 %s123, 1
        %s250 = smul.addr %s249, 32
        %s251 = scalar_lea.vmem [#allocation8], %s250
        %s252 = smul.u32 4, %s25
        %s253 = smul.u32 4, %s25
        %s254 = smul.u32 4, %s25
        %s255 = smul.u32 4, %s25
        %v256 = vld [vmem:[%s221] sm:$0xff]
        %v257 = vld [vmem:[%s221 + $0x8] sm:$0xff]
        %v258 = vld [vmem:[%s221 + $0x10] sm:$0xff]
        %v259 = vld [vmem:[%s221 + $0x18] sm:$0xff]
        %260 = vadd.xlane.f32.xlu0 %v256
        %v261 = vpop.xlane.xlu0 %260
        %262 = vadd.xlane.f32.xlu0 %v257
        %v263 = vpop.xlane.xlu0 %262
        %264 = vadd.xlane.f32.xlu0 %v258
        %v265 = vpop.xlane.xlu0 %264
        %266 = vadd.xlane.f32.xlu0 %v259
        %v267 = vpop.xlane.xlu0 %266
        %v268 = vmul.f32 %v261, 0.0078125
        %v269 = vmul.f32 %v263, 0.0078125
        %v270 = vmul.f32 %v265, 0.0078125
        %v271 = vmul.f32 %v267, 0.0078125
        %v272 = vsub.f32 %v256, %v268
        %v273 = vsub.f32 %v257, %v269
        %v274 = vsub.f32 %v258, %v270
        %v275 = vsub.f32 %v259, %v271
        %v276 = vmul.f32 %v272, %v272
        %v277 = vmul.f32 %v273, %v273
        %v278 = vmul.f32 %v274, %v274
        %v279 = vmul.f32 %v275, %v275
        %280 = vadd.xlane.f32.xlu0 %v276
        %v281 = vpop.xlane.xlu0 %280
        %282 = vadd.xlane.f32.xlu0 %v277
        %v283 = vpop.xlane.xlu0 %282
        %284 = vadd.xlane.f32.xlu0 %v278
        %v285 = vpop.xlane.xlu0 %284
        %286 = vadd.xlane.f32.xlu0 %v279
        %v287 = vpop.xlane.xlu0 %286
        %v288 = vmul.f32 %v281, 0.0078125
        %v289 = vmul.f32 %v283, 0.0078125
        %v290 = vmul.f32 %v285, 0.0078125
        %v291 = vmul.f32 %v287, 0.0078125
        %v292 = vadd.f32 %v288, 1e-06
        %v293 = vadd.f32 %v289, 1e-06
        %v294 = vadd.f32 %v290, 1e-06
        %v295 = vadd.f32 %v291, 1e-06
        %v296 = vrsqrt.pop %v292
        %v297 = vrsqrt.pop %v293
        %v298 = vrsqrt.pop %v294
        %v299 = vrsqrt.pop %v295
        %v300 = vld [vmem:[#allocation5] sm:$0xff]
        %v301 = vld [vmem:[#allocation5 + $0x8] sm:$0xff]
        %v302 = vld [vmem:[#allocation5 + $0x10] sm:$0xff]
        %v303 = vld [vmem:[#allocation5 + $0x18] sm:$0xff]
        %v304 = vmul.f32 %v300, %v296
        %v305 = vmul.f32 %v301, %v297
        %v306 = vmul.f32 %v302, %v298
        %v307 = vmul.f32 %v303, %v299
        %v308 = vld [vmem:[#allocation7] sm:$0xff]
        %v309 = vld [vmem:[#allocation7 + $0x8] sm:$0xff]
        %v310 = vld [vmem:[#allocation7 + $0x10] sm:$0xff]
        %v311 = vld [vmem:[#allocation7 + $0x18] sm:$0xff]
        %v312 = vmul.f32 %v268, %v304
        %v313 = vmul.f32 %v269, %v305
        %v314 = vmul.f32 %v270, %v306
        %v315 = vmul.f32 %v271, %v307
        %v316 = vsub.f32 %v308, %v312
        %v317 = vsub.f32 %v309, %v313
        %v318 = vsub.f32 %v310, %v314
        %v319 = vsub.f32 %v311, %v315
        %v320 = vmul.f32 %v256, %v304
        %v321 = vmul.f32 %v257, %v305
        %v322 = vmul.f32 %v258, %v306
        %v323 = vmul.f32 %v259, %v307
        %v324 = vadd.f32 %v320, %v316
        %v325 = vadd.f32 %v321, %v317
        %v326 = vadd.f32 %v322, %v318
        %v327 = vadd.f32 %v323, %v319
        %328 = vst [vmem:[%s251] sm:$0xff] %v324
        %329 = vst [vmem:[%s251 + $0x8] sm:$0xff] %v325
        %330 = vst [vmem:[%s251 + $0x10] sm:$0xff] %v326
        %331 = vst [vmem:[%s251 + $0x18] sm:$0xff] %v327
        %s332 = sand.u32 %s123, 1
        %s333 = scalar_lea.sflag [#allocation4], %s332
        %s334 = sand.u32 %s123, 1
        %s335 = smul.addr %s334, 32
        %s336 = scalar_lea.vmem [#allocation8], %s335
        // Predicated region
        $region45: #{tpu_custom_call.1} parent=31 // pred_check
          %p337 = pneg %p133
        $region46: #{tpu_custom_call.1} parent=31 // pred_check_branch
          %339 = sbr.rel (%p337) target = $region48
        $region47: #{tpu_custom_call.1} parent=31 // pred_region
          %s340 = smul.u32 4, %s25
          %s342 = ssub.s32 512, 512
          %343 = vsyncadd %s333, %s342
          %s344 = smul.addr %s26, 4
          %s345 = sadd.s32 %s340, %s344
          %s346 = smul.addr %s345, 128
          %s347 = scalar_lea.hbm %s3, %s346
          %s348 = sshll.u32 %s336, 4
          %s349 = int_to_ptr.vmem [resolvable:$true] %s348
          %354 = dma.vmem_to_hbm [thread:$0]  %s349, 512, %s347, %s333, 128, 128, 8
        $region48: #{tpu_custom_call.1} parent=31 // pred_fallthru
          _
      $region32: #{tpu_custom_call.1} parent=5 // pred_fallthru
        _
      %p355 = scmp.le.s32.totalorder 2, %s16
      // Predicated region
      $region49: #{tpu_custom_call.1} parent=5 // pred_check
        %p356 = pneg %p355
      $region50: #{tpu_custom_call.1} parent=5 // pred_check_branch
        %358 = sbr.rel (%p356) target = $region52
      $region51: #{tpu_custom_call.1} parent=5 // pred_region
        %s359 = ssub.s32 %s16, 2
        // Predicated region
        $region53: #{tpu_custom_call.1} parent=51 // pred_check
          %p360 = pneg %p139
        $region54: #{tpu_custom_call.1} parent=51 // pred_check_branch
          %362 = sbr.rel (%p360) target = $region56
        $region55: #{tpu_custom_call.1} parent=51 // pred_region
          %s363 = sand.u32 %s124, 1
          %s364 = scalar_lea.sflag [#allocation4], %s363
          %s365 = sand.u32 %s124, 1
          %s366 = smul.addr %s365, 32
          %s367 = scalar_lea.vmem [#allocation8], %s366
          %368 = dma.done %s364, 512
        $region56: #{tpu_custom_call.1} parent=51 // pred_fallthru
          _
      $region52: #{tpu_custom_call.1} parent=5 // pred_fallthru
        _
    $region6: #{tpu_custom_call.1} parent=1 // loop_footer
      %s20 = sadd.s32 1, %s16
    $region7: #{tpu_custom_call.1} parent=1 // loop_footer_branch
      %15 = sbr.rel target = $region3
    $region8: #{tpu_custom_call.1} parent=1 // loop_exit
      _
    %369 = vsyncpa [#allocation3], 1
    %s370 = scalar_lea.sflag [#allocation3], 1
    %371 = vsyncpa %s370, 1
    %372 = vsyncpa [#allocation6], 1
    %373 = vsyncpa [#allocation4], 1
    %s374 = scalar_lea.sflag [#allocation4], 1
    %375 = vsyncpa %s374, 1

</llo_original>
